<compile_context>
chip_gen: v7x
topology: tpu7x:2x2x1
jax: 0.10.0
libtpu: 0.0.40
codegen_flags: <defaults>
</compile_context>

<pallas_src>
import functools

import jax
import jax.numpy as jnp
from jax.experimental import pallas as pl
from jax.experimental.pallas import tpu as pltpu

NUM_CLASSES = 4
WEIGHTS = (1.0, 1.0, 1.0, 1.0)
SMOOTH = 1e-05

LANES = 128           # vreg lane width
MAX_TILE_ROWS = 1024  # 1024 * 128 = 128K pixels/class/tile -> 2 MiB f32 block


def _dice_loss_kernel(logits_ref, labels_ref, inter_ref, psum_ref, tsum_ref,
                      *, num_classes, tile_rows, acc_rows, n_tiles,
                      rem_valid, masked_last):
    n = pl.program_id(1)

    # Output blocks are indexed by b only -> resident in VMEM across the
    # n (spatial-tile) axis.  Zero them at the start of each batch slice.
    @pl.when(n == 0)
    def _init():
        inter_ref[...] = jnp.zeros_like(inter_ref)
        psum_ref[...] = jnp.zeros_like(psum_ref)
        tsum_ref[...] = jnp.zeros_like(tsum_ref)

    def tile_reduce(v):
        # (tile_rows, 128) -> (acc_rows, 128) using pure vreg adds (no XLU).
        if tile_rows % 8 == 0:
            return jnp.sum(v.reshape(tile_rows // 8, 8, LANES), axis=0)
        return v  # small single-tile case: acc_rows == tile_rows

    def accumulate(apply_mask):
        # Cast after load: HBM keeps the caller's dtype (f32 or bf16).
        xs = [logits_ref[0, c].astype(jnp.float32) for c in range(num_classes)]
        labels = labels_ref[0].astype(jnp.int32)

        if apply_mask:
            row = jax.lax.broadcasted_iota(jnp.int32, (tile_rows, LANES), 0)
            lane = jax.lax.broadcasted_iota(jnp.int32, (tile_rows, LANES), 1)
            valid = (row * LANES + lane) < rem_valid
            # Clamp garbage / zero-padded positions before exp so NaN/Inf
            # never reaches the sums; padded labels become -1 (no class).
            xs = [jnp.where(valid, v, jnp.float32(0.0)) for v in xs]
            labels = jnp.where(valid, labels, jnp.int32(-1))

        # Numerically-stable softmax across the C stacked (tile_rows, 128)
        # planes: elementwise max/exp/add only (VPU + EUP slots).
        m = xs[0]
        for c in range(1, num_classes):
            m = jnp.maximum(m, xs[c])
        e = [jnp.exp(v - m) for v in xs]
        denom = e[0]
        for c in range(1, num_classes):
            denom = denom + e[c]
        # Exact reciprocal (approx=True is cheaper but risks the 1e-5 check).
        inv = pl.reciprocal(denom, approx=False)
        if apply_mask:
            inv = jnp.where(valid, inv, jnp.float32(0.0))  # padded preds -> 0

        # Class 0 (ignore_index / background) only feeds the softmax denom,
        # exactly as in the PyTorch module.
        for c in range(1, num_classes):
            pred = e[c] * inv                            # (tile_rows, 128)
            tmask = (labels == c).astype(jnp.float32)    # (tile_rows, 128)
            inter_ref[0, c - 1] = inter_ref[0, c - 1] + tile_reduce(pred * tmask)
            psum_ref[0, c - 1] = psum_ref[0, c - 1] + tile_reduce(pred)
            tsum_ref[0, c - 1] = tsum_ref[0, c - 1] + tile_reduce(tmask)

    if masked_last and n_tiles > 1:
        # Only the last spatial tile can contain padding / OOB rows: gate the
        # masking work so full tiles pay nothing for it.
        is_last = n == (n_tiles - 1)

        @pl.when(jnp.logical_not(is_last))
        def _full_tile():
            accumulate(False)

        @pl.when(is_last)
        def _partial_tile():
            accumulate(True)
    else:
        accumulate(masked_last)


def dice_loss(logits, true, *, num_classes=NUM_CLASSES, weights=WEIGHTS,
              smooth=SMOOTH):
    """logits: (B, C, H, W) float, true: (B, H, W) int -> scalar float32."""
    B, C, H, W = logits.shape
    assert C == num_classes
    HW = H * W

    # Free reshapes: no transpose, no dtype upcast of logits.
    logits_f = logits.reshape(B, C, HW)
    true_f = true.reshape(B, HW)

    # Only pad (full-tensor copy) when HW is not a multiple of the lane width.
    hw128 = -(-HW // LANES) * LANES
    if hw128 != HW:
        logits_f = jnp.pad(logits_f, ((0, 0), (0, 0), (0, hw128 - HW)))
        true_f = jnp.pad(true_f, ((0, 0), (0, hw128 - HW)))
    rows = hw128 // LANES

    # Tile sizing: either one full-extent tile (any row count) or fixed
    # MAX_TILE_ROWS tiles with an uneven, in-kernel-masked last tile.
    if rows <= MAX_TILE_ROWS:
        tile_rows, n_tiles = rows, 1
    else:
        tile_rows, n_tiles = MAX_TILE_ROWS, -(-rows // MAX_TILE_ROWS)
    acc_rows = 8 if tile_rows % 8 == 0 else tile_rows
    masked_last = (n_tiles * tile_rows * LANES) != HW
    rem_valid = HW - (n_tiles - 1) * tile_rows * LANES  # valid elems, last tile

    # int8 labels when the tile obeys int8 sublane tiling -> 4x less traffic.
    label_dtype = jnp.int8 if tile_rows % 32 == 0 else jnp.int32
    true_f = true_f.astype(label_dtype)

    logits_r = logits_f.reshape(B, C, rows, LANES)
    true_r = true_f.reshape(B, rows, LANES)

    kernel = functools.partial(
        _dice_loss_kernel,
        num_classes=num_classes,
        tile_rows=tile_rows,
        acc_rows=acc_rows,
        n_tiles=n_tiles,
        rem_valid=rem_valid,
        masked_last=masked_last,
    )

    nc = num_classes - 1
    part_shape = jax.ShapeDtypeStruct((B, nc, acc_rows, LANES), jnp.float32)
    part_spec = pl.BlockSpec((1, nc, acc_rows, LANES), lambda b, n: (b, 0, 0, 0))

    inter_p, psum_p, tsum_p = pl.pallas_call(
        kernel,
        out_shape=(part_shape, part_shape, part_shape),
        grid_spec=pltpu.PrefetchScalarGridSpec(
            num_scalar_prefetch=0,
            grid=(B, n_tiles),
            in_specs=[
                pl.BlockSpec((1, C, tile_rows, LANES),
                             lambda b, n: (b, 0, n, 0)),
                pl.BlockSpec((1, tile_rows, LANES),
                             lambda b, n: (b, n, 0)),
            ],
            out_specs=[part_spec, part_spec, part_spec],
        ),
        compiler_params=pltpu.CompilerParams(
            # Batch axis is independent (per-b partial outputs) -> parallel;
            # spatial-tile axis accumulates into resident blocks -> arbitrary.
            dimension_semantics=("parallel", "arbitrary"),
            vmem_limit_bytes=32 * 1024 * 1024,
        ),
    )(logits_r, true_r)

    # Tiny epilogue on the partials (runs as plain JAX; negligible work).
    inter = jnp.sum(inter_p, axis=(0, 2, 3))                       # (C-1,)
    union = jnp.sum(psum_p, axis=(0, 2, 3)) + jnp.sum(tsum_p, axis=(0, 2, 3))
    dice = (2.0 * inter + smooth) / (union + smooth)
    w = jnp.asarray([float(weights[c]) for c in range(1, num_classes)],
                    jnp.float32)
    return jnp.sum((1.0 - dice) * w) / (num_classes - 1)


def _dice_loss_ref(logits, true, *, num_classes=NUM_CLASSES, weights=WEIGHTS,
                   smooth=SMOOTH):
    probs = jax.nn.softmax(logits.astype(jnp.float32), axis=1)
    loss = 0.0
    for class_idx in range(1, num_classes):
        pred = probs[:, class_idx, :, :]
        true_class = (true == class_idx).astype(jnp.float32)
        intersection = jnp.sum(pred * true_class)
        union = jnp.sum(pred) + jnp.sum(true_class)
        dice_class = (2.0 * intersection + smooth) / (union + smooth)
        loss = loss + (1.0 - dice_class) * weights[class_idx]
    return loss / (num_classes - 1)


if __name__ == "__main__":
    key = jax.random.PRNGKey(0)
    k_logits, k_true = jax.random.split(key)

    B, C, H, W = 2, NUM_CLASSES, 16, 16
    logits = jax.random.normal(k_logits, (B, C, H, W), dtype=jnp.float32)
    true = jax.random.randint(k_true, (B, H, W), 0, NUM_CLASSES, dtype=jnp.int32)

    out = jax.block_until_ready(dice_loss(logits, true))
    ref = jax.block_until_ready(_dice_loss_ref(logits, true))
    assert jnp.allclose(out, ref, atol=1e-5, rtol=1e-5), (out, ref)

    print("KERNEL_OK")
</pallas_src>

<mosaic_0001>
module attributes {stable_mosaic.version = 11 : i64} {
  func.func @_dice_loss_kernel(%arg0: i32, %arg1: i32, %arg2: memref<1x4x2x128xf32, #tpu.memory_space<vmem>>, %arg3: memref<1x2x128xi32, #tpu.memory_space<vmem>>, %arg4: memref<1x3x2x128xf32, #tpu.memory_space<vmem>>, %arg5: memref<1x3x2x128xf32, #tpu.memory_space<vmem>>, %arg6: memref<1x3x2x128xf32, #tpu.memory_space<vmem>>) attributes {dimension_semantics = [#tpu.dimension_semantics<parallel>, #tpu.dimension_semantics<arbitrary>], iteration_bounds = array<i64: 2, 1>, scalar_prefetch = 0 : i64, scratch_operands = 0 : i64, tpu.core_type = #tpu.core_type<tc>, window_params = [{transform_indices = @transform_0, window_bounds = array<i64: 1, 4, 2, 128>}, {transform_indices = @transform_1, window_bounds = array<i64: 1, 2, 128>}, {transform_indices = @transform_2, window_bounds = array<i64: 1, 3, 2, 128>}, {transform_indices = @transform_3, window_bounds = array<i64: 1, 3, 2, 128>}, {transform_indices = @transform_4, window_bounds = array<i64: 1, 3, 2, 128>}]} {
    %c0_i32 = arith.constant 0 : i32
    %0 = arith.cmpi eq, %arg1, %c0_i32 : i32
    %1 = arith.extui %0 : i1 to i32
    %c0_i32_0 = arith.constant 0 : i32
    %2 = arith.cmpi ne, %1, %c0_i32_0 : i32
    scf.if %2 {
      %cst = arith.constant 0.000000e+00 : f32
      %100 = vector.broadcast %cst : f32 to vector<1x3x2x128xf32>
      %c0_88 = arith.constant 0 : index
      %c0_89 = arith.constant 0 : index
      %c0_90 = arith.constant 0 : index
      %c0_91 = arith.constant 0 : index
      %101 = vector.load %arg4[%c0_88, %c0_89, %c0_90, %c0_91] : memref<1x3x2x128xf32, #tpu.memory_space<vmem>>, vector<1x3x2x128xf32>
      tpu.vector_store %arg4[%c0_88, %c0_89, %c0_90, %c0_91], %100 {strides = array<i32>} : memref<1x3x2x128xf32, #tpu.memory_space<vmem>>, vector<1x3x2x128xf32>,
      %cst_92 = arith.constant 0.000000e+00 : f32
      %102 = vector.broadcast %cst_92 : f32 to vector<1x3x2x128xf32>
      %c0_93 = arith.constant 0 : index
      %c0_94 = arith.constant 0 : index
      %c0_95 = arith.constant 0 : index
      %c0_96 = arith.constant 0 : index
      %103 = vector.load %arg5[%c0_93, %c0_94, %c0_95, %c0_96] : memref<1x3x2x128xf32, #tpu.memory_space<vmem>>, vector<1x3x2x128xf32>
      tpu.vector_store %arg5[%c0_93, %c0_94, %c0_95, %c0_96], %102 {strides = array<i32>} : memref<1x3x2x128xf32, #tpu.memory_space<vmem>>, vector<1x3x2x128xf32>,
      %cst_97 = arith.constant 0.000000e+00 : f32
      %104 = vector.broadcast %cst_97 : f32 to vector<1x3x2x128xf32>
      %c0_98 = arith.constant 0 : index
      %c0_99 = arith.constant 0 : index
      %c0_100 = arith.constant 0 : index
      %c0_101 = arith.constant 0 : index
      %105 = vector.load %arg6[%c0_98, %c0_99, %c0_100, %c0_101] : memref<1x3x2x128xf32, #tpu.memory_space<vmem>>, vector<1x3x2x128xf32>
      tpu.vector_store %arg6[%c0_98, %c0_99, %c0_100, %c0_101], %104 {strides = array<i32>} : memref<1x3x2x128xf32, #tpu.memory_space<vmem>>, vector<1x3x2x128xf32>,
    } else {
    }
    %c0 = arith.constant 0 : index
    %c0_1 = arith.constant 0 : index
    %c0_2 = arith.constant 0 : index
    %c0_3 = arith.constant 0 : index
    %3 = vector.load %arg2[%c0, %c0_1, %c0_2, %c0_3] : memref<1x4x2x128xf32, #tpu.memory_space<vmem>>, vector<1x1x2x128xf32>
    %4 = vector.shape_cast %3 : vector<1x1x2x128xf32> to vector<2x128xf32>
    %c0_4 = arith.constant 0 : index
    %c1 = arith.constant 1 : index
    %c0_5 = arith.constant 0 : index
    %c0_6 = arith.constant 0 : index
    %5 = vector.load %arg2[%c0_4, %c1, %c0_5, %c0_6] : memref<1x4x2x128xf32, #tpu.memory_space<vmem>>, vector<1x1x2x128xf32>
    %6 = vector.shape_cast %5 : vector<1x1x2x128xf32> to vector<2x128xf32>
    %c0_7 = arith.constant 0 : index
    %c2 = arith.constant 2 : index
    %c0_8 = arith.constant 0 : index
    %c0_9 = arith.constant 0 : index
    %7 = vector.load %arg2[%c0_7, %c2, %c0_8, %c0_9] : memref<1x4x2x128xf32, #tpu.memory_space<vmem>>, vector<1x1x2x128xf32>
    %8 = vector.shape_cast %7 : vector<1x1x2x128xf32> to vector<2x128xf32>
    %c0_10 = arith.constant 0 : index
    %c3 = arith.constant 3 : index
    %c0_11 = arith.constant 0 : index
    %c0_12 = arith.constant 0 : index
    %9 = vector.load %arg2[%c0_10, %c3, %c0_11, %c0_12] : memref<1x4x2x128xf32, #tpu.memory_space<vmem>>, vector<1x1x2x128xf32>
    %10 = vector.shape_cast %9 : vector<1x1x2x128xf32> to vector<2x128xf32>
    %c0_13 = arith.constant 0 : index
    %c0_14 = arith.constant 0 : index
    %c0_15 = arith.constant 0 : index
    %11 = vector.load %arg3[%c0_13, %c0_14, %c0_15] : memref<1x2x128xi32, #tpu.memory_space<vmem>>, vector<1x2x128xi32>
    %12 = vector.shape_cast %11 : vector<1x2x128xi32> to vector<2x128xi32>
    %13 = arith.maximumf %4, %6 : vector<2x128xf32>
    %14 = arith.maximumf %13, %8 : vector<2x128xf32>
    %15 = arith.maximumf %14, %10 : vector<2x128xf32>
    %16 = arith.subf %4, %15 : vector<2x128xf32>
    %17 = math.exp %16 : vector<2x128xf32>
    %18 = arith.subf %6, %15 : vector<2x128xf32>
    %19 = math.exp %18 : vector<2x128xf32>
    %20 = arith.subf %8, %15 : vector<2x128xf32>
    %21 = math.exp %20 : vector<2x128xf32>
    %22 = arith.subf %10, %15 : vector<2x128xf32>
    %23 = math.exp %22 : vector<2x128xf32>
    %24 = arith.addf %17, %19 : vector<2x128xf32>
    %25 = arith.addf %24, %21 : vector<2x128xf32>
    %26 = arith.addf %25, %23 : vector<2x128xf32>
    %27 = tpu.reciprocal %26 : vector<2x128xf32> -> vector<2x128xf32>
    %28 = arith.mulf %19, %27 : vector<2x128xf32>
    %c1_i32 = arith.constant 1 : i32
    %29 = vector.broadcast %c1_i32 : i32 to vector<2x128xi32>
    %30 = arith.cmpi eq, %12, %29 : vector<2x128xi32>
    %31 = arith.extui %30 : vector<2x128xi1> to vector<2x128xi32>
    %32 = arith.sitofp %31 : vector<2x128xi32> to vector<2x128xf32>
    %c0_16 = arith.constant 0 : index
    %c0_17 = arith.constant 0 : index
    %c0_18 = arith.constant 0 : index
    %c0_19 = arith.constant 0 : index
    %33 = vector.load %arg4[%c0_16, %c0_17, %c0_18, %c0_19] : memref<1x3x2x128xf32, #tpu.memory_space<vmem>>, vector<1x1x2x128xf32>
    %34 = vector.shape_cast %33 : vector<1x1x2x128xf32> to vector<2x128xf32>
    %35 = arith.mulf %28, %32 : vector<2x128xf32>
    %36 = arith.addf %34, %35 : vector<2x128xf32>
    %c0_20 = arith.constant 0 : index
    %c0_21 = arith.constant 0 : index
    %c0_22 = arith.constant 0 : index
    %c0_23 = arith.constant 0 : index
    %37 = vector.load %arg4[%c0_20, %c0_21, %c0_22, %c0_23] : memref<1x3x2x128xf32, #tpu.memory_space<vmem>>, vector<1x1x2x128xf32>
    %38 = vector.shape_cast %37 : vector<1x1x2x128xf32> to vector<2x128xf32>
    %39 = vector.shape_cast %36 : vector<2x128xf32> to vector<1x1x2x128xf32>
    tpu.vector_store %arg4[%c0_20, %c0_21, %c0_22, %c0_23], %39 {strides = array<i32>} : memref<1x3x2x128xf32, #tpu.memory_space<vmem>>, vector<1x1x2x128xf32>,
    %c0_24 = arith.constant 0 : index
    %c0_25 = arith.constant 0 : index
    %c0_26 = arith.constant 0 : index
    %c0_27 = arith.constant 0 : index
    %40 = vector.load %arg5[%c0_24, %c0_25, %c0_26, %c0_27] : memref<1x3x2x128xf32, #tpu.memory_space<vmem>>, vector<1x1x2x128xf32>
    %41 = vector.shape_cast %40 : vector<1x1x2x128xf32> to vector<2x128xf32>
    %42 = arith.addf %41, %28 : vector<2x128xf32>
    %c0_28 = arith.constant 0 : index
    %c0_29 = arith.constant 0 : index
    %c0_30 = arith.constant 0 : index
    %c0_31 = arith.constant 0 : index
    %43 = vector.load %arg5[%c0_28, %c0_29, %c0_30, %c0_31] : memref<1x3x2x128xf32, #tpu.memory_space<vmem>>, vector<1x1x2x128xf32>
    %44 = vector.shape_cast %43 : vector<1x1x2x128xf32> to vector<2x128xf32>
    %45 = vector.shape_cast %42 : vector<2x128xf32> to vector<1x1x2x128xf32>
    tpu.vector_store %arg5[%c0_28, %c0_29, %c0_30, %c0_31], %45 {strides = array<i32>} : memref<1x3x2x128xf32, #tpu.memory_space<vmem>>, vector<1x1x2x128xf32>,
    %c0_32 = arith.constant 0 : index
    %c0_33 = arith.constant 0 : index
    %c0_34 = arith.constant 0 : index
    %c0_35 = arith.constant 0 : index
    %46 = vector.load %arg6[%c0_32, %c0_33, %c0_34, %c0_35] : memref<1x3x2x128xf32, #tpu.memory_space<vmem>>, vector<1x1x2x128xf32>
    %47 = vector.shape_cast %46 : vector<1x1x2x128xf32> to vector<2x128xf32>
    %48 = arith.addf %47, %32 : vector<2x128xf32>
    %c0_36 = arith.constant 0 : index
    %c0_37 = arith.constant 0 : index
    %c0_38 = arith.constant 0 : index
    %c0_39 = arith.constant 0 : index
    %49 = vector.load %arg6[%c0_36, %c0_37, %c0_38, %c0_39] : memref<1x3x2x128xf32, #tpu.memory_space<vmem>>, vector<1x1x2x128xf32>
    %50 = vector.shape_cast %49 : vector<1x1x2x128xf32> to vector<2x128xf32>
    %51 = vector.shape_cast %48 : vector<2x128xf32> to vector<1x1x2x128xf32>
    tpu.vector_store %arg6[%c0_36, %c0_37, %c0_38, %c0_39], %51 {strides = array<i32>} : memref<1x3x2x128xf32, #tpu.memory_space<vmem>>, vector<1x1x2x128xf32>,
    %52 = arith.mulf %21, %27 : vector<2x128xf32>
    %c2_i32 = arith.constant 2 : i32
    %53 = vector.broadcast %c2_i32 : i32 to vector<2x128xi32>
    %54 = arith.cmpi eq, %12, %53 : vector<2x128xi32>
    %55 = arith.extui %54 : vector<2x128xi1> to vector<2x128xi32>
    %56 = arith.sitofp %55 : vector<2x128xi32> to vector<2x128xf32>
    %c0_40 = arith.constant 0 : index
    %c1_41 = arith.constant 1 : index
    %c0_42 = arith.constant 0 : index
    %c0_43 = arith.constant 0 : index
    %57 = vector.load %arg4[%c0_40, %c1_41, %c0_42, %c0_43] : memref<1x3x2x128xf32, #tpu.memory_space<vmem>>, vector<1x1x2x128xf32>
    %58 = vector.shape_cast %57 : vector<1x1x2x128xf32> to vector<2x128xf32>
    %59 = arith.mulf %52, %56 : vector<2x128xf32>
    %60 = arith.addf %58, %59 : vector<2x128xf32>
    %c0_44 = arith.constant 0 : index
    %c1_45 = arith.constant 1 : index
    %c0_46 = arith.constant 0 : index
    %c0_47 = arith.constant 0 : index
    %61 = vector.load %arg4[%c0_44, %c1_45, %c0_46, %c0_47] : memref<1x3x2x128xf32, #tpu.memory_space<vmem>>, vector<1x1x2x128xf32>
    %62 = vector.shape_cast %61 : vector<1x1x2x128xf32> to vector<2x128xf32>
    %63 = vector.shape_cast %60 : vector<2x128xf32> to vector<1x1x2x128xf32>
    tpu.vector_store %arg4[%c0_44, %c1_45, %c0_46, %c0_47], %63 {strides = array<i32>} : memref<1x3x2x128xf32, #tpu.memory_space<vmem>>, vector<1x1x2x128xf32>,
    %c0_48 = arith.constant 0 : index
    %c1_49 = arith.constant 1 : index
    %c0_50 = arith.constant 0 : index
    %c0_51 = arith.constant 0 : index
    %64 = vector.load %arg5[%c0_48, %c1_49, %c0_50, %c0_51] : memref<1x3x2x128xf32, #tpu.memory_space<vmem>>, vector<1x1x2x128xf32>
    %65 = vector.shape_cast %64 : vector<1x1x2x128xf32> to vector<2x128xf32>
    %66 = arith.addf %65, %52 : vector<2x128xf32>
    %c0_52 = arith.constant 0 : index
    %c1_53 = arith.constant 1 : index
    %c0_54 = arith.constant 0 : index
    %c0_55 = arith.constant 0 : index
    %67 = vector.load %arg5[%c0_52, %c1_53, %c0_54, %c0_55] : memref<1x3x2x128xf32, #tpu.memory_space<vmem>>, vector<1x1x2x128xf32>
    %68 = vector.shape_cast %67 : vector<1x1x2x128xf32> to vector<2x128xf32>
    %69 = vector.shape_cast %66 : vector<2x128xf32> to vector<1x1x2x128xf32>
    tpu.vector_store %arg5[%c0_52, %c1_53, %c0_54, %c0_55], %69 {strides = array<i32>} : memref<1x3x2x128xf32, #tpu.memory_space<vmem>>, vector<1x1x2x128xf32>,
    %c0_56 = arith.constant 0 : index
    %c1_57 = arith.constant 1 : index
    %c0_58 = arith.constant 0 : index
    %c0_59 = arith.constant 0 : index
    %70 = vector.load %arg6[%c0_56, %c1_57, %c0_58, %c0_59] : memref<1x3x2x128xf32, #tpu.memory_space<vmem>>, vector<1x1x2x128xf32>
    %71 = vector.shape_cast %70 : vector<1x1x2x128xf32> to vector<2x128xf32>
    %72 = arith.addf %71, %56 : vector<2x128xf32>
    %c0_60 = arith.constant 0 : index
    %c1_61 = arith.constant 1 : index
    %c0_62 = arith.constant 0 : index
    %c0_63 = arith.constant 0 : index
    %73 = vector.load %arg6[%c0_60, %c1_61, %c0_62, %c0_63] : memref<1x3x2x128xf32, #tpu.memory_space<vmem>>, vector<1x1x2x128xf32>
    %74 = vector.shape_cast %73 : vector<1x1x2x128xf32> to vector<2x128xf32>
    %75 = vector.shape_cast %72 : vector<2x128xf32> to vector<1x1x2x128xf32>
    tpu.vector_store %arg6[%c0_60, %c1_61, %c0_62, %c0_63], %75 {strides = array<i32>} : memref<1x3x2x128xf32, #tpu.memory_space<vmem>>, vector<1x1x2x128xf32>,
    %76 = arith.mulf %23, %27 : vector<2x128xf32>
    %c3_i32 = arith.constant 3 : i32
    %77 = vector.broadcast %c3_i32 : i32 to vector<2x128xi32>
    %78 = arith.cmpi eq, %12, %77 : vector<2x128xi32>
    %79 = arith.extui %78 : vector<2x128xi1> to vector<2x128xi32>
    %80 = arith.sitofp %79 : vector<2x128xi32> to vector<2x128xf32>
    %c0_64 = arith.constant 0 : index
    %c2_65 = arith.constant 2 : index
    %c0_66 = arith.constant 0 : index
    %c0_67 = arith.constant 0 : index
    %81 = vector.load %arg4[%c0_64, %c2_65, %c0_66, %c0_67] : memref<1x3x2x128xf32, #tpu.memory_space<vmem>>, vector<1x1x2x128xf32>
    %82 = vector.shape_cast %81 : vector<1x1x2x128xf32> to vector<2x128xf32>
    %83 = arith.mulf %76, %80 : vector<2x128xf32>
    %84 = arith.addf %82, %83 : vector<2x128xf32>
    %c0_68 = arith.constant 0 : index
    %c2_69 = arith.constant 2 : index
    %c0_70 = arith.constant 0 : index
    %c0_71 = arith.constant 0 : index
    %85 = vector.load %arg4[%c0_68, %c2_69, %c0_70, %c0_71] : memref<1x3x2x128xf32, #tpu.memory_space<vmem>>, vector<1x1x2x128xf32>
    %86 = vector.shape_cast %85 : vector<1x1x2x128xf32> to vector<2x128xf32>
    %87 = vector.shape_cast %84 : vector<2x128xf32> to vector<1x1x2x128xf32>
    tpu.vector_store %arg4[%c0_68, %c2_69, %c0_70, %c0_71], %87 {strides = array<i32>} : memref<1x3x2x128xf32, #tpu.memory_space<vmem>>, vector<1x1x2x128xf32>,
    %c0_72 = arith.constant 0 : index
    %c2_73 = arith.constant 2 : index
    %c0_74 = arith.constant 0 : index
    %c0_75 = arith.constant 0 : index
    %88 = vector.load %arg5[%c0_72, %c2_73, %c0_74, %c0_75] : memref<1x3x2x128xf32, #tpu.memory_space<vmem>>, vector<1x1x2x128xf32>
    %89 = vector.shape_cast %88 : vector<1x1x2x128xf32> to vector<2x128xf32>
    %90 = arith.addf %89, %76 : vector<2x128xf32>
    %c0_76 = arith.constant 0 : index
    %c2_77 = arith.constant 2 : index
    %c0_78 = arith.constant 0 : index
    %c0_79 = arith.constant 0 : index
    %91 = vector.load %arg5[%c0_76, %c2_77, %c0_78, %c0_79] : memref<1x3x2x128xf32, #tpu.memory_space<vmem>>, vector<1x1x2x128xf32>
    %92 = vector.shape_cast %91 : vector<1x1x2x128xf32> to vector<2x128xf32>
    %93 = vector.shape_cast %90 : vector<2x128xf32> to vector<1x1x2x128xf32>
    tpu.vector_store %arg5[%c0_76, %c2_77, %c0_78, %c0_79], %93 {strides = array<i32>} : memref<1x3x2x128xf32, #tpu.memory_space<vmem>>, vector<1x1x2x128xf32>,
    %c0_80 = arith.constant 0 : index
    %c2_81 = arith.constant 2 : index
    %c0_82 = arith.constant 0 : index
    %c0_83 = arith.constant 0 : index
    %94 = vector.load %arg6[%c0_80, %c2_81, %c0_82, %c0_83] : memref<1x3x2x128xf32, #tpu.memory_space<vmem>>, vector<1x1x2x128xf32>
    %95 = vector.shape_cast %94 : vector<1x1x2x128xf32> to vector<2x128xf32>
    %96 = arith.addf %95, %80 : vector<2x128xf32>
    %c0_84 = arith.constant 0 : index
    %c2_85 = arith.constant 2 : index
    %c0_86 = arith.constant 0 : index
    %c0_87 = arith.constant 0 : index
    %97 = vector.load %arg6[%c0_84, %c2_85, %c0_86, %c0_87] : memref<1x3x2x128xf32, #tpu.memory_space<vmem>>, vector<1x1x2x128xf32>
    %98 = vector.shape_cast %97 : vector<1x1x2x128xf32> to vector<2x128xf32>
    %99 = vector.shape_cast %96 : vector<2x128xf32> to vector<1x1x2x128xf32>
    tpu.vector_store %arg6[%c0_84, %c2_85, %c0_86, %c0_87], %99 {strides = array<i32>} : memref<1x3x2x128xf32, #tpu.memory_space<vmem>>, vector<1x1x2x128xf32>,
    return
  }
  func.func @transform_0(%arg0: i32, %arg1: i32) -> (i32, i32, i32, i32) {
    %c0_i32 = arith.constant 0 : i32
    %c0_i32_0 = arith.constant 0 : i32
    %c0_i32_1 = arith.constant 0 : i32
    return %arg0, %c0_i32, %arg1, %c0_i32_0 : i32, i32, i32, i32
  }
  func.func @transform_1(%arg0: i32, %arg1: i32) -> (i32, i32, i32) {
    %c0_i32 = arith.constant 0 : i32
    %c0_i32_0 = arith.constant 0 : i32
    return %arg0, %arg1, %c0_i32 : i32, i32, i32
  }
  func.func @transform_2(%arg0: i32, %arg1: i32) -> (i32, i32, i32, i32) {
    %c0_i32 = arith.constant 0 : i32
    %c0_i32_0 = arith.constant 0 : i32
    %c0_i32_1 = arith.constant 0 : i32
    %c0_i32_2 = arith.constant 0 : i32
    return %arg0, %c0_i32, %c0_i32_0, %c0_i32_1 : i32, i32, i32, i32
  }
  func.func @transform_3(%arg0: i32, %arg1: i32) -> (i32, i32, i32, i32) {
    %c0_i32 = arith.constant 0 : i32
    %c0_i32_0 = arith.constant 0 : i32
    %c0_i32_1 = arith.constant 0 : i32
    %c0_i32_2 = arith.constant 0 : i32
    return %arg0, %c0_i32, %c0_i32_0, %c0_i32_1 : i32, i32, i32, i32
  }
  func.func @transform_4(%arg0: i32, %arg1: i32) -> (i32, i32, i32, i32) {
    %c0_i32 = arith.constant 0 : i32
    %c0_i32_0 = arith.constant 0 : i32
    %c0_i32_1 = arith.constant 0 : i32
    %c0_i32_2 = arith.constant 0 : i32
    return %arg0, %c0_i32, %c0_i32_0, %c0_i32_1 : i32, i32, i32, i32
  }
}

</mosaic_0001>

<llo_original>
// kernel: tpu_custom_call.1
$region0: #{tpu_custom_call.1}
  #allocation0 [shape = 'u32[]', space=smem, size = 0x4, offset = 0x4, fixed_abs, tag = 'smem constant byte address 0x4 - core index']
  #allocation1 [shape = 'u32[144,128]{1,0:T(1,128)}', space=vmem, size = 0x12000, scoped, tag = 'internal scratch']
  %s0 = inlined_call_operand.hbm [shape: f32[2,4,2,128], index: 0, kind: input, shape index: {}]
  %s1 = inlined_call_operand.hbm [shape: s32[2,2,128], index: 1, kind: input, shape index: {}]
  %s2 = inlined_call_operand.hbm [shape: f32[2,3,2,128], index: 2, kind: output, shape index: {0}]
  %s3 = inlined_call_operand.hbm [shape: f32[2,3,2,128], index: 3, kind: output, shape index: {1}]
  %s4 = inlined_call_operand.hbm [shape: f32[2,3,2,128], index: 4, kind: output, shape index: {2}]
  %5 = xla_tuple %s2, %s3, %s4
  %s6 = sld [smem:[#allocation0]]
  $region69: #{tpu_custom_call.1} parent=0
    _
  %s8 = ssub.s32 1, %s6
  %s9 = scalar_select 0, %s8, %s6
  $region1: #{tpu_custom_call.1} parent=0
    #allocation2 [shape = 'u8[8192]{0}', space=vmem, size = 0x2000, scoped, tag = 'input window, operand 0']
    #allocation3 [shape = 's32[2]{0}', space=sflag, size = 0x8, scoped, tag = 'scoped memory for tpu_custom_call.1']
    #allocation4 [shape = 's32[2]{0}', space=sflag, size = 0x8, scoped, tag = 'scoped memory for tpu_custom_call.1']
    #allocation5 [shape = 'u8[2048]{0}', space=vmem, size = 0x800, scoped, tag = 'input window, operand 1']
    #allocation6 [shape = 's32[2]{0}', space=sflag, size = 0x8, scoped, tag = 'scoped memory for tpu_custom_call.1']
    #allocation7 [shape = 'u8[6144]{0}', space=vmem, size = 0x1800, scoped, tag = 'output window, operand 0']
    #allocation8 [shape = 'u8[6144]{0}', space=vmem, size = 0x1800, scoped, tag = 'output window, operand 1']
    #allocation9 [shape = 's32[2]{0}', space=sflag, size = 0x8, scoped, tag = 'scoped memory for tpu_custom_call.1']
    #allocation10 [shape = 'u8[6144]{0}', space=vmem, size = 0x1800, scoped, tag = 'output window, operand 2']
    %10 = vsyncpa [#allocation3], 0
    %s11 = scalar_lea.sflag [#allocation3], 1
    %12 = vsyncpa %s11, 0
    %13 = vsyncpa [#allocation6], 0
    %s14 = scalar_lea.sflag [#allocation6], 1
    %15 = vsyncpa %s14, 0
    %16 = vsyncpa [#allocation4], 0
    %s17 = scalar_lea.sflag [#allocation4], 1
    %18 = vsyncpa %s17, 0
    %19 = vsyncpa [#allocation9], 0
    %s20 = scalar_lea.sflag [#allocation9], 1
    %21 = vsyncpa %s20, 0
    loop: start=0, step=1, limit=4
    $region2: #{tpu_custom_call.1} parent=1 // loop_pre_header
      _
    $region3: #{tpu_custom_call.1} parent=1 // loop_header
      %s23 = sphi 0, %s27
      %p24 = scmp.ge.s32.totalorder %s23, 4
      %s30 = sphi 0, %s42
      %s31 = sphi 0, %s38
      %s32 = sphi 0, %s30
      %s33 = sphi 0, %s31
      %s34 = sphi 0, %s32
      %s35 = sphi 0, %s33
      %s47 = sphi 0, %s49
      %s50 = sphi 0, %s47
      %s51 = sphi 0, %s50
      %s67 = sphi 0, %s51
      %s75 = sphi 0, %s77
      %s78 = sphi 0, %s75
      %s79 = sphi 0, %s78
      %s95 = sphi 0, %s79
      %s101 = sphi 0, %s103
      %s104 = sphi 0, %s101
      %s105 = sphi 0, %s104
      %s121 = sphi 0, %s105
      %s127 = sphi 0, %s129
      %s130 = sphi 0, %s127
      %s131 = sphi 0, %s130
      %s147 = sphi 0, %s131
      %s153 = sphi 0, %s155
      %s156 = sphi 0, %s153
      %s157 = sphi 0, %s156
      %s173 = sphi 0, %s157
    $region4: #{tpu_custom_call.1} parent=1 // loop_header_branch
      %26 = sbr.rel (%p24) target = $region8
    $region5: #{tpu_custom_call.1} parent=1 // loop_body
      %s28 = ssub.s32 %s23, 1
      %s29 = ssub.s32 %s23, 2
      %s36 = sadd.s32 1, %s31
      %p37 = scmp.ge.s32.totalorder %s36, 1
      %s38 = scalar_select %p37, 0, %s36
      %s39 = sadd.s32 1, %s30
      %s40 = scalar_select %p37, %s39, %s30
      %p41 = scmp.ge.s32.totalorder %s40, 2
      %s42 = scalar_select %p41, 0, %s40
      %s43 = ssub.s32 %s30, %s42
      %s44 = ssub.s32 %s31, %s38
      %s45 = sor.u32 %s43, %s44
      %p46 = scmp.eq.s32.totalorder %s45, 0
      %s48 = sadd.s32 %s47, 1
      %s49 = scalar_select %p46, %s47, %s48
      %p52 = pneg %p46
      %p53 = scmp.eq.s32.totalorder %s23, 1
      %p54 = por %p52, %p53
      %p55 = scmp.ne.s32.totalorder %s47, %s50
      %p56 = scmp.eq.s32.totalorder %s23, 0
      %p57 = por %p55, %p56
      %p58 = scmp.ne.s32.totalorder %s47, %s50
      %p59 = scmp.eq.s32.totalorder %s28, 1
      %p60 = por %p58, %p59
      %p61 = scmp.ne.s32.totalorder %s50, %s51
      %p62 = scmp.eq.s32.totalorder %s28, 0
      %p63 = por %p61, %p62
      %p64 = scmp.ne.s32.totalorder %s50, %s51
      %p65 = scmp.eq.s32.totalorder %s29, 1
      %p66 = por %p64, %p65
      %p68 = scmp.ne.s32.totalorder %s51, %s67
      %p69 = scmp.eq.s32.totalorder %s29, 0
      %p70 = por %p68, %p69
      %s71 = ssub.s32 %s30, %s42
      %s72 = ssub.s32 %s31, %s38
      %s73 = sor.u32 %s71, %s72
      %p74 = scmp.eq.s32.totalorder %s73, 0
      %s76 = sadd.s32 %s75, 1
      %s77 = scalar_select %p74, %s75, %s76
      %p80 = pneg %p74
      %p81 = scmp.eq.s32.totalorder %s23, 1
      %p82 = por %p80, %p81
      %p83 = scmp.ne.s32.totalorder %s75, %s78
      %p84 = scmp.eq.s32.totalorder %s23, 0
      %p85 = por %p83, %p84
      %p86 = scmp.ne.s32.totalorder %s75, %s78
      %p87 = scmp.eq.s32.totalorder %s28, 1
      %p88 = por %p86, %p87
      %p89 = scmp.ne.s32.totalorder %s78, %s79
      %p90 = scmp.eq.s32.totalorder %s28, 0
      %p91 = por %p89, %p90
      %p92 = scmp.ne.s32.totalorder %s78, %s79
      %p93 = scmp.eq.s32.totalorder %s29, 1
      %p94 = por %p92, %p93
      %p96 = scmp.ne.s32.totalorder %s79, %s95
      %p97 = scmp.eq.s32.totalorder %s29, 0
      %p98 = por %p96, %p97
      %s99 = ssub.s32 %s30, %s42
      %p100 = scmp.eq.s32.totalorder %s99, 0
      %s102 = sadd.s32 %s101, 1
      %s103 = scalar_select %p100, %s101, %s102
      %p106 = pneg %p100
      %p107 = scmp.eq.s32.totalorder %s23, 1
      %p108 = por %p106, %p107
      %p109 = scmp.ne.s32.totalorder %s101, %s104
      %p110 = scmp.eq.s32.totalorder %s23, 0
      %p111 = por %p109, %p110
      %p112 = scmp.ne.s32.totalorder %s101, %s104
      %p113 = scmp.eq.s32.totalorder %s28, 1
      %p114 = por %p112, %p113
      %p115 = scmp.ne.s32.totalorder %s104, %s105
      %p116 = scmp.eq.s32.totalorder %s28, 0
      %p117 = por %p115, %p116
      %p118 = scmp.ne.s32.totalorder %s104, %s105
      %p119 = scmp.eq.s32.totalorder %s29, 1
      %p120 = por %p118, %p119
      %p122 = scmp.ne.s32.totalorder %s105, %s121
      %p123 = scmp.eq.s32.totalorder %s29, 0
      %p124 = por %p122, %p123
      %s125 = ssub.s32 %s30, %s42
      %p126 = scmp.eq.s32.totalorder %s125, 0
      %s128 = sadd.s32 %s127, 1
      %s129 = scalar_select %p126, %s127, %s128
      %p132 = pneg %p126
      %p133 = scmp.eq.s32.totalorder %s23, 1
      %p134 = por %p132, %p133
      %p135 = scmp.ne.s32.totalorder %s127, %s130
      %p136 = scmp.eq.s32.totalorder %s23, 0
      %p137 = por %p135, %p136
      %p138 = scmp.ne.s32.totalorder %s127, %s130
      %p139 = scmp.eq.s32.totalorder %s28, 1
      %p140 = por %p138, %p139
      %p141 = scmp.ne.s32.totalorder %s130, %s131
      %p142 = scmp.eq.s32.totalorder %s28, 0
      %p143 = por %p141, %p142
      %p144 = scmp.ne.s32.totalorder %s130, %s131
      %p145 = scmp.eq.s32.totalorder %s29, 1
      %p146 = por %p144, %p145
      %p148 = scmp.ne.s32.totalorder %s131, %s147
      %p149 = scmp.eq.s32.totalorder %s29, 0
      %p150 = por %p148, %p149
      %s151 = ssub.s32 %s30, %s42
      %p152 = scmp.eq.s32.totalorder %s151, 0
      %s154 = sadd.s32 %s153, 1
      %s155 = scalar_select %p152, %s153, %s154
      %p158 = pneg %p152
      %p159 = scmp.eq.s32.totalorder %s23, 1
      %p160 = por %p158, %p159
      %p161 = scmp.ne.s32.totalorder %s153, %s156
      %p162 = scmp.eq.s32.totalorder %s23, 0
      %p163 = por %p161, %p162
      %p164 = scmp.ne.s32.totalorder %s153, %s156
      %p165 = scmp.eq.s32.totalorder %s28, 1
      %p166 = por %p164, %p165
      %p167 = scmp.ne.s32.totalorder %s156, %s157
      %p168 = scmp.eq.s32.totalorder %s28, 0
      %p169 = por %p167, %p168
      %p170 = scmp.ne.s32.totalorder %s156, %s157
      %p171 = scmp.eq.s32.totalorder %s29, 1
      %p172 = por %p170, %p171
      %p174 = scmp.ne.s32.totalorder %s157, %s173
      %p175 = scmp.eq.s32.totalorder %s29, 0
      %p176 = por %p174, %p175
      %p177 = scmp.le.s32.totalorder 1, %s23
      %p178 = scmp.lt.s32.totalorder %s23, 3
      %p179 = pnand %p177, %p178
      %p180 = pneg %p179
      // Predicated region
      $region9: #{tpu_custom_call.1} parent=5 // pred_check
        _
      $region10: #{tpu_custom_call.1} parent=5 // pred_check_branch
        %182 = sbr.rel (%p179) target = $region12
      $region11: #{tpu_custom_call.1} parent=5 // pred_region
        %s183 = ssub.s32 %s23, 1
      $region12: #{tpu_custom_call.1} parent=5 // pred_fallthru
        _
      %p184 = scmp.lt.s32.totalorder %s23, 2
      // Predicated region
      $region13: #{tpu_custom_call.1} parent=5 // pred_check
        %p185 = pneg %p184
      $region14: #{tpu_custom_call.1} parent=5 // pred_check_branch
        %187 = sbr.rel (%p185) target = $region16
      $region15: #{tpu_custom_call.1} parent=5 // pred_region
        // Predicated region
        $region17: #{tpu_custom_call.1} parent=15 // pred_check
          %p188 = pneg %p57
        $region18: #{tpu_custom_call.1} parent=15 // pred_check_branch
          %190 = sbr.rel (%p188) target = $region20
        $region19: #{tpu_custom_call.1} parent=15 // pred_region
          %s191 = sand.u32 %s47, 1
          %s192 = scalar_lea.sflag [#allocation3], %s191
          %s193 = sand.u32 %s47, 1
          %s194 = smul.addr %s193, 8
          %s195 = scalar_lea.vmem [#allocation2], %s194
          %s197 = ssub.s32 128, 128
          %198 = vsyncadd %s192, %s197
          %s199 = smul.addr %s30, 4
          %s200 = sadd.s32 %s31, %s199
          %s201 = smul.addr %s200, 32
          %s202 = scalar_lea.hbm %s0, %s201
          %s203 = sshll.u32 %s195, 4
          %s204 = int_to_ptr.vmem [resolvable:$true] %s203
          %209 = dma.hbm_to_vmem [thread:$0]  %s202, 128, %s204, %s192, 32, 32, 2
        $region20: #{tpu_custom_call.1} parent=15 // pred_fallthru
          _
        // Predicated region
        $region21: #{tpu_custom_call.1} parent=15 // pred_check
          %p210 = pneg %p85
        $region22: #{tpu_custom_call.1} parent=15 // pred_check_branch
          %212 = sbr.rel (%p210) target = $region24
        $region23: #{tpu_custom_call.1} parent=15 // pred_region
          %s213 = sand.u32 %s75, 1
          %s214 = scalar_lea.sflag [#allocation6], %s213
          %s215 = sand.u32 %s75, 1
          %s216 = smul.addr %s215, 2
          %s217 = scalar_lea.vmem [#allocation5], %s216
          %s219 = ssub.s32 32, 32
          %220 = vsyncadd %s214, %s219
          %s221 = sadd.s32 %s31, %s30
          %s222 = smul.addr %s221, 32
          %s223 = scalar_lea.hbm %s1, %s222
          %s225 = sshll.u32 %s217, 4
          %s226 = int_to_ptr.vmem [resolvable:$true] %s225
          %228 = dma.hbm_to_vmem [thread:$0]  %s223, 32, %s226, %s214
        $region24: #{tpu_custom_call.1} parent=15 // pred_fallthru
          _
      $region16: #{tpu_custom_call.1} parent=5 // pred_fallthru
        _
      %p229 = scmp.le.s32.totalorder 1, %s23
      %p230 = scmp.lt.s32.totalorder %s23, 3
      %p231 = pnand %p229, %p230
      %p232 = pneg %p231
      // Predicated region
      $region25: #{tpu_custom_call.1} parent=5 // pred_check
        _
      $region26: #{tpu_custom_call.1} parent=5 // pred_check_branch
        %234 = sbr.rel (%p231) target = $region28
      $region27: #{tpu_custom_call.1} parent=5 // pred_region
        %s235 = ssub.s32 %s23, 1
        %s236 = sand.u32 %s50, 1
        %s237 = scalar_lea.sflag [#allocation3], %s236
        %s238 = sand.u32 %s50, 1
        %s239 = smul.addr %s238, 8
        %s240 = scalar_lea.vmem [#allocation2], %s239
        // Predicated region
        $region29: #{tpu_custom_call.1} parent=27 // pred_check
          %p241 = pneg %p63
        $region30: #{tpu_custom_call.1} parent=27 // pred_check_branch
          %243 = sbr.rel (%p241) target = $region32
        $region31: #{tpu_custom_call.1} parent=27 // pred_region
          %244 = dma.done %s237, 128
        $region32: #{tpu_custom_call.1} parent=27 // pred_fallthru
          _
        %s245 = sand.u32 %s78, 1
        %s246 = scalar_lea.sflag [#allocation6], %s245
        %s247 = sand.u32 %s78, 1
        %s248 = smul.addr %s247, 2
        %s249 = scalar_lea.vmem [#allocation5], %s248
        // Predicated region
        $region33: #{tpu_custom_call.1} parent=27 // pred_check
          %p250 = pneg %p91
        $region34: #{tpu_custom_call.1} parent=27 // pred_check_branch
          %252 = sbr.rel (%p250) target = $region36
        $region35: #{tpu_custom_call.1} parent=27 // pred_region
          %253 = dma.done %s246, 32
        $region36: #{tpu_custom_call.1} parent=27 // pred_fallthru
          _
        %s254 = sand.u32 %s50, 1
        %s255 = scalar_lea.sflag [#allocation3], %s254
        %s256 = sand.u32 %s50, 1
        %s257 = smul.addr %s256, 8
        %s258 = scalar_lea.vmem [#allocation2], %s257
        %p259 = pneg %p63
        %p260 = pneg %p60
        %s261 = sand.u32 %s78, 1
        %s262 = scalar_lea.sflag [#allocation6], %s261
        %s263 = sand.u32 %s78, 1
        %s264 = smul.addr %s263, 2
        %s265 = scalar_lea.vmem [#allocation5], %s264
        %p266 = pneg %p91
        %p267 = pneg %p88
        %p268 = pneg %p117
        %p269 = pneg %p114
        %s270 = sand.u32 %s104, 1
        %s271 = scalar_lea.sflag [#allocation4], %s270
        %s272 = sand.u32 %s104, 1
        %s273 = smul.addr %s272, 6
        %s274 = scalar_lea.vmem [#allocation7], %s273
        %p275 = pneg %p143
        %p276 = pneg %p140
        %s277 = sand.u32 %s28, 1
        %s278 = scalar_lea.sflag [#allocation9], %s277
        %s279 = sand.u32 %s130, 1
        %s280 = smul.addr %s279, 6
        %s281 = scalar_lea.vmem [#allocation8], %s280
        %p282 = pneg %p169
        %p283 = pneg %p166
        %s284 = sand.u32 %s28, 1
        %s285 = scalar_lea.sflag [#allocation9], %s284
        %s286 = sand.u32 %s156, 1
        %s287 = smul.addr %s286, 6
        %s288 = scalar_lea.vmem [#allocation10], %s287
        %p289 = scmp.eq.s32.totalorder %s33, 0
        // Predicated region
        $region37: #{tpu_custom_call.1} parent=27 // pred_check
          %p290 = pneg %p289
        $region38: #{tpu_custom_call.1} parent=27 // pred_check_branch
          %292 = sbr.rel (%p290) target = $region40
        $region39: #{tpu_custom_call.1} parent=27 // pred_region
          %293 = vst [vmem:[%s274] sm:$0x3] 0.0
          %294 = vst [vmem:[%s274 + $0x2] sm:$0x3] 0.0
          %295 = vst [vmem:[%s274 + $0x4] sm:$0x3] 0.0
          %296 = vst [vmem:[%s281] sm:$0x3] 0.0
          %297 = vst [vmem:[%s281 + $0x2] sm:$0x3] 0.0
          %298 = vst [vmem:[%s281 + $0x4] sm:$0x3] 0.0
          %299 = vst [vmem:[%s288] sm:$0x3] 0.0
          %300 = vst [vmem:[%s288 + $0x2] sm:$0x3] 0.0
          %301 = vst [vmem:[%s288 + $0x4] sm:$0x3] 0.0
        $region40: #{tpu_custom_call.1} parent=27 // pred_fallthru
          _
        %v302 = vld [vmem:[%s240] sm:$0x3]
        %s303 = scalar_lea.vmem %s240, 2 [#allocation2]
        %v304 = vld [vmem:[%s303] sm:$0x3]
        %s305 = scalar_lea.vmem %s240, 4 [#allocation2]
        %v306 = vld [vmem:[%s305] sm:$0x3]
        %s307 = scalar_lea.vmem %s240, 6 [#allocation2]
        %v308 = vld [vmem:[%s307] sm:$0x3]
        %v309 = vld [vmem:[%s249] sm:$0x3]
        %v310 = vmax.f32 %v302, %v304
        %v311 = vmax.f32 %v310, %v306
        %v312 = vmax.f32 %v311, %v308
        %v313 = vsub.f32 %v302, %v312
        %v314 = vmul.f32 %v313, 1.442695
        %v315 = vpow.pop %v314
        %v316 = vsub.f32 %v304, %v312
        %v317 = vmul.f32 %v316, 1.442695
        %v318 = vpow.pop %v317
        %v319 = vsub.f32 %v306, %v312
        %v320 = vmul.f32 %v319, 1.442695
        %v321 = vpow.pop %v320
        %v322 = vsub.f32 %v308, %v312
        %v323 = vmul.f32 %v322, 1.442695
        %v324 = vpow.pop %v323
        %v325 = vadd.f32 %v315, %v318
        %v326 = vadd.f32 %v325, %v321
        %v327 = vadd.f32 %v326, %v324
        %v328 = vrcp.pop %v327
        %v329 = vmul.f32 %v318, %v328
        %vm330 = vcmp.eq.s32.totalorder %v309, 1
        %v331 = vsel %vm330, 1, 0
        %v332 = vcvt.s32.f32 %v331
        %v333 = vld [vmem:[%s274] sm:$0x3]
        %v334 = vmul.f32 %v329, %v332
        %v335 = vadd.f32 %v333, %v334
        %336 = vst [vmem:[%s274] sm:$0x3] %v335
        %v337 = vld [vmem:[%s281] sm:$0x3]
        %v338 = vadd.f32 %v337, %v329
        %339 = vst [vmem:[%s281] sm:$0x3] %v338
        %v340 = vld [vmem:[%s288] sm:$0x3]
        %v341 = vadd.f32 %v340, %v332
        %342 = vst [vmem:[%s288] sm:$0x3] %v341
        %v343 = vmul.f32 %v321, %v328
        %vm344 = vcmp.eq.s32.totalorder %v309, 2
        %v345 = vsel %vm344, 1, 0
        %v346 = vcvt.s32.f32 %v345
        %s347 = scalar_lea.vmem %s274, 2 [#allocation7]
        %v348 = vld [vmem:[%s347] sm:$0x3]
        %v349 = vmul.f32 %v343, %v346
        %v350 = vadd.f32 %v348, %v349
        %351 = vst [vmem:[%s347] sm:$0x3] %v350
        %s352 = scalar_lea.vmem %s281, 2 [#allocation8]
        %v353 = vld [vmem:[%s352] sm:$0x3]
        %v354 = vadd.f32 %v353, %v343
        %355 = vst [vmem:[%s352] sm:$0x3] %v354
        %s356 = scalar_lea.vmem %s288, 2 [#allocation10]
        %v357 = vld [vmem:[%s356] sm:$0x3]
        %v358 = vadd.f32 %v357, %v346
        %359 = vst [vmem:[%s356] sm:$0x3] %v358
        %v360 = vmul.f32 %v324, %v328
        %vm361 = vcmp.eq.s32.totalorder %v309, 3
        %v362 = vsel %vm361, 1, 0
        %v363 = vcvt.s32.f32 %v362
        %s364 = scalar_lea.vmem %s274, 4 [#allocation7]
        %v365 = vld [vmem:[%s364] sm:$0x3]
        %v366 = vmul.f32 %v360, %v363
        %v367 = vadd.f32 %v365, %v366
        %368 = vst [vmem:[%s364] sm:$0x3] %v367
        %s369 = scalar_lea.vmem %s281, 4 [#allocation8]
        %v370 = vld [vmem:[%s369] sm:$0x3]
        %v371 = vadd.f32 %v370, %v360
        %372 = vst [vmem:[%s369] sm:$0x3] %v371
        %s373 = scalar_lea.vmem %s288, 4 [#allocation10]
        %v374 = vld [vmem:[%s373] sm:$0x3]
        %v375 = vadd.f32 %v374, %v363
        %376 = vst [vmem:[%s373] sm:$0x3] %v375
        %s377 = sand.u32 %s104, 1
        %s378 = scalar_lea.sflag [#allocation4], %s377
        %s379 = sand.u32 %s104, 1
        %s380 = smul.addr %s379, 6
        %s381 = scalar_lea.vmem [#allocation7], %s380
        %s382 = sand.u32 %s28, 1
        %s383 = scalar_lea.sflag [#allocation9], %s382
        %s384 = sand.u32 %s130, 1
        %s385 = smul.addr %s384, 6
        %s386 = scalar_lea.vmem [#allocation8], %s385
        %s387 = sand.u32 %s28, 1
        %s388 = scalar_lea.sflag [#allocation9], %s387
        %s389 = sand.u32 %s156, 1
        %s390 = smul.addr %s389, 6
        %s391 = scalar_lea.vmem [#allocation10], %s390
        // Predicated region
        $region41: #{tpu_custom_call.1} parent=27 // pred_check
          %p392 = pneg %p114
        $region42: #{tpu_custom_call.1} parent=27 // pred_check_branch
          %394 = sbr.rel (%p392) target = $region44
        $region43: #{tpu_custom_call.1} parent=27 // pred_region
          %s396 = ssub.s32 96, 96
          %397 = vsyncadd %s378, %s396
          %s398 = smul.addr %s32, 3
          %s399 = smul.addr %s398, 32
          %s400 = scalar_lea.hbm %s2, %s399
          %s401 = sshll.u32 %s381, 4
          %s402 = int_to_ptr.vmem [resolvable:$true] %s401
          %407 = dma.vmem_to_hbm [thread:$0]  %s402, 96, %s400, %s378, 32, 32, 2
        $region44: #{tpu_custom_call.1} parent=27 // pred_fallthru
          _
        // Predicated region
        $region45: #{tpu_custom_call.1} parent=27 // pred_check
          %p408 = pneg %p140
        $region46: #{tpu_custom_call.1} parent=27 // pred_check_branch
          %410 = sbr.rel (%p408) target = $region48
        $region47: #{tpu_custom_call.1} parent=27 // pred_region
          %s412 = ssub.s32 96, 96
          %413 = vsyncadd %s383, %s412
          %s414 = smul.addr %s32, 3
          %s415 = smul.addr %s414, 32
          %s416 = scalar_lea.hbm %s3, %s415
          %s417 = sshll.u32 %s386, 4
          %s418 = int_to_ptr.vmem [resolvable:$true] %s417
          %423 = dma.vmem_to_hbm [thread:$0]  %s418, 96, %s416, %s383, 32, 32, 2
        $region48: #{tpu_custom_call.1} parent=27 // pred_fallthru
          _
        // Predicated region
        $region49: #{tpu_custom_call.1} parent=27 // pred_check
          %p424 = pneg %p166
        $region50: #{tpu_custom_call.1} parent=27 // pred_check_branch
          %426 = sbr.rel (%p424) target = $region52
        $region51: #{tpu_custom_call.1} parent=27 // pred_region
          %s428 = ssub.s32 96, 96
          %429 = vsyncadd %s388, %s428
          %s430 = smul.addr %s32, 3
          %s431 = smul.addr %s430, 32
          %s432 = scalar_lea.hbm %s4, %s431
          %s433 = sshll.u32 %s391, 4
          %s434 = int_to_ptr.vmem [resolvable:$true] %s433
          %439 = dma.vmem_to_hbm [thread:$0]  %s434, 96, %s432, %s388, 32, 32, 2
        $region52: #{tpu_custom_call.1} parent=27 // pred_fallthru
          _
      $region28: #{tpu_custom_call.1} parent=5 // pred_fallthru
        _
      %p440 = scmp.le.s32.totalorder 2, %s23
      // Predicated region
      $region53: #{tpu_custom_call.1} parent=5 // pred_check
        %p441 = pneg %p440
      $region54: #{tpu_custom_call.1} parent=5 // pred_check_branch
        %443 = sbr.rel (%p441) target = $region56
      $region55: #{tpu_custom_call.1} parent=5 // pred_region
        %s444 = ssub.s32 %s23, 2
        // Predicated region
        $region57: #{tpu_custom_call.1} parent=55 // pred_check
          %p445 = pneg %p120
        $region58: #{tpu_custom_call.1} parent=55 // pred_check_branch
          %447 = sbr.rel (%p445) target = $region60
        $region59: #{tpu_custom_call.1} parent=55 // pred_region
          %s448 = sand.u32 %s105, 1
          %s449 = scalar_lea.sflag [#allocation4], %s448
          %s450 = sand.u32 %s105, 1
          %s451 = smul.addr %s450, 6
          %s452 = scalar_lea.vmem [#allocation7], %s451
          %453 = dma.done %s449, 96
        $region60: #{tpu_custom_call.1} parent=55 // pred_fallthru
          _
        // Predicated region
        $region61: #{tpu_custom_call.1} parent=55 // pred_check
          %p454 = pneg %p146
        $region62: #{tpu_custom_call.1} parent=55 // pred_check_branch
          %456 = sbr.rel (%p454) target = $region64
        $region63: #{tpu_custom_call.1} parent=55 // pred_region
          %s457 = sand.u32 %s29, 1
          %s458 = scalar_lea.sflag [#allocation9], %s457
          %s459 = sand.u32 %s131, 1
          %s460 = smul.addr %s459, 6
          %s461 = scalar_lea.vmem [#allocation8], %s460
          %462 = dma.done %s458, 96
        $region64: #{tpu_custom_call.1} parent=55 // pred_fallthru
          _
        // Predicated region
        $region65: #{tpu_custom_call.1} parent=55 // pred_check
          %p463 = pneg %p172
        $region66: #{tpu_custom_call.1} parent=55 // pred_check_branch
          %465 = sbr.rel (%p463) target = $region68
        $region67: #{tpu_custom_call.1} parent=55 // pred_region
          %s466 = sand.u32 %s29, 1
          %s467 = scalar_lea.sflag [#allocation9], %s466
          %s468 = sand.u32 %s157, 1
          %s469 = smul.addr %s468, 6
          %s470 = scalar_lea.vmem [#allocation10], %s469
          %471 = dma.done %s467, 96
        $region68: #{tpu_custom_call.1} parent=55 // pred_fallthru
          _
      $region56: #{tpu_custom_call.1} parent=5 // pred_fallthru
        _
    $region6: #{tpu_custom_call.1} parent=1 // loop_footer
      %s27 = sadd.s32 1, %s23
    $region7: #{tpu_custom_call.1} parent=1 // loop_footer_branch
      %22 = sbr.rel target = $region3
    $region8: #{tpu_custom_call.1} parent=1 // loop_exit
      _
    %472 = vsyncpa [#allocation3], 1
    %s473 = scalar_lea.sflag [#allocation3], 1
    %474 = vsyncpa %s473, 1
    %475 = vsyncpa [#allocation6], 1
    %s476 = scalar_lea.sflag [#allocation6], 1
    %477 = vsyncpa %s476, 1
    %478 = vsyncpa [#allocation4], 1
    %s479 = scalar_lea.sflag [#allocation4], 1
    %480 = vsyncpa %s479, 1
    %481 = vsyncpa [#allocation9], 1
    %s482 = scalar_lea.sflag [#allocation9], 1
    %483 = vsyncpa %s482, 1

</llo_original>
